<compile_context>
chip_gen: v6e
topology: v6e:2x2x1
jax: 0.10.0
libtpu: 0.0.40
codegen_flags: <defaults>
</compile_context>

<pallas_src>
import functools

import jax
import jax.numpy as jnp
from jax.experimental import pallas as pl
from jax.experimental.pallas import tpu as pltpu

LANE = 128
MAX_TILE = 1024  # per-tile VMEM is tiny (<~1 MB) even at 1024 rows


def _round_up(n, m):
    return ((n + m - 1) // m) * m


def mlp_kernel(x_ref, w1_ref, b1_ref, w2_ref, b2_ref, *out_refs,
               n_out, emit_logits, emit_action):
    # hidden = relu(x @ W1 + b1): bf16 operands on the MXU, fp32 accumulate,
    # fp32 bias/ReLU epilogue on the VPU.
    h = jnp.dot(x_ref[...], w1_ref[...], preferred_element_type=jnp.float32)
    h = jnp.maximum(h + b1_ref[...], 0.0)
    # logits = h @ W2 + b2. W2 is stored bf16 (HBM savings); upcast in VMEM so the
    # second matmul keeps fp32 precision on the already-fp32 hidden activations.
    y = jnp.dot(h, w2_ref[...].astype(jnp.float32),
                preferred_element_type=jnp.float32) + b2_ref[...]

    ref_idx = 0
    if emit_logits:
        # Padded lanes of W2/b2 are zero -> padded logits are 0; full-width store.
        out_refs[ref_idx][...] = y.astype(out_refs[ref_idx].dtype)
        ref_idx += 1
    if emit_action:
        # Fused greedy argmax over the real n_out lanes (first-max tiebreak).
        col = jax.lax.broadcasted_iota(jnp.int32, y.shape, 1)
        masked = jnp.where(col < n_out, y, -jnp.inf)
        m = jnp.max(masked, axis=-1, keepdims=True)
        idx = jnp.where(masked == m, col, y.shape[-1])
        a = jnp.min(idx, axis=-1, keepdims=True)
        a = jnp.where(a >= n_out, 0, a)  # all-NaN row guard: match jnp.argmax -> 0
        out_refs[ref_idx][...] = a.astype(jnp.int32)


def init_params(key, input_size, hidden_size, output_size):
    """nn.Linear-style uniform init. Weights stored transposed (in, out), zero-padded
    ONCE to kernel-friendly shapes, and cast to bf16 (biases stay fp32)."""
    k1, k2, k3, k4 = jax.random.split(key, 4)
    lim1 = 1.0 / (input_size ** 0.5)
    lim2 = 1.0 / (hidden_size ** 0.5)
    w1 = jax.random.uniform(k1, (input_size, hidden_size), jnp.float32, -lim1, lim1)
    b1 = jax.random.uniform(k2, (hidden_size,), jnp.float32, -lim1, lim1)
    w2 = jax.random.uniform(k3, (hidden_size, output_size), jnp.float32, -lim2, lim2)
    b2 = jax.random.uniform(k4, (output_size,), jnp.float32, -lim2, lim2)

    in_p = _round_up(max(input_size, 16), 16)   # contraction dim: no 128-lane pad needed
    hid_p = _round_up(hidden_size, LANE)
    out_p = _round_up(output_size, LANE)        # lane-dense logits -> unmasked stores
    params = dict(
        w1=jnp.zeros((in_p, hid_p), jnp.bfloat16)
            .at[:input_size, :hidden_size].set(w1.astype(jnp.bfloat16)),
        b1=jnp.zeros((1, hid_p), jnp.float32).at[0, :hidden_size].set(b1),
        w2=jnp.zeros((hid_p, out_p), jnp.bfloat16)
            .at[:hidden_size, :output_size].set(w2.astype(jnp.bfloat16)),
        b2=jnp.zeros((1, out_p), jnp.float32).at[0, :output_size].set(b2),
    )
    ref = dict(w1=w1, b1=b1, w2=w2, b2=b2)  # unpadded fp32 copies for reference check
    return params, ref


@functools.partial(jax.jit, static_argnames=("input_size", "output_size", "mode"))
def _forward_impl(x, w1, b1, w2, b2, *, input_size, output_size, mode):
    B = x.shape[0]
    in_p = w1.shape[0]
    out_p = w2.shape[1]

    # Batch tiling: one big tile up to MAX_TILE rows; beyond that an EVEN number of
    # tiles so v7x's two TensorCores split the "parallel" batch axis evenly.
    if B <= MAX_TILE:
        n_tiles = 1
        tb = _round_up(max(B, 16), 16)
    else:
        n_tiles = 2 * pl.cdiv(B, 2 * MAX_TILE)
        tb = _round_up(pl.cdiv(B, n_tiles), 16)
    b_pad = tb * n_tiles

    x_p = jnp.zeros((b_pad, in_p), jnp.bfloat16).at[:B, :input_size].set(
        x.astype(jnp.bfloat16))

    emit_logits = mode in ("logits", "both")
    emit_action = mode in ("act", "both")
    out_shapes, out_specs = [], []
    if emit_logits:
        out_shapes.append(jax.ShapeDtypeStruct((b_pad, out_p), jnp.float32))
        out_specs.append(pl.BlockSpec((tb, out_p), lambda i: (i, 0)))
    if emit_action:
        out_shapes.append(jax.ShapeDtypeStruct((b_pad, 1), jnp.int32))
        out_specs.append(pl.BlockSpec((tb, 1), lambda i: (i, 0)))

    kernel = functools.partial(mlp_kernel, n_out=output_size,
                               emit_logits=emit_logits, emit_action=emit_action)
    outs = pl.pallas_call(
        kernel,
        out_shape=tuple(out_shapes),
        grid=(n_tiles,),
        in_specs=[
            pl.BlockSpec((tb, in_p), lambda i: (i, 0)),   # batch-tiled activations
            pl.BlockSpec(w1.shape, lambda i: (0, 0)),     # weights resident across grid
            pl.BlockSpec(b1.shape, lambda i: (0, 0)),
            pl.BlockSpec(w2.shape, lambda i: (0, 0)),
            pl.BlockSpec(b2.shape, lambda i: (0, 0)),
        ],
        out_specs=tuple(out_specs),
        compiler_params=pltpu.CompilerParams(
            dimension_semantics=("parallel",)),            # batch tiles split across TCs
    )(x_p, w1, b1, w2, b2)

    results = []
    idx = 0
    if emit_logits:
        results.append(outs[idx][:B, :output_size])
        idx += 1
    if emit_action:
        results.append(outs[idx][:B, 0])
    return tuple(results)


def network_forward(x, params, input_size, output_size):
    """Matches Network.forward: logits of shape (B, output_size)."""
    (logits,) = _forward_impl(x, params["w1"], params["b1"], params["w2"], params["b2"],
                              input_size=input_size, output_size=output_size,
                              mode="logits")
    return logits


def network_act(x, params, input_size, output_size):
    """Fused forward + greedy argmax; logits are never written to HBM."""
    (act,) = _forward_impl(x, params["w1"], params["b1"], params["w2"], params["b2"],
                           input_size=input_size, output_size=output_size,
                           mode="act")
    return act


if __name__ == "__main__":
    # Snake-game-like sizes: 11 state features -> 32 hidden -> 3 actions.
    input_size, hidden_size, output_size = 11, 32, 3
    key = jax.random.PRNGKey(0)
    kp, kx1, kx2, kx3 = jax.random.split(key, 4)
    params, ref_p = init_params(kp, input_size, hidden_size, output_size)

    # Reference uses the same bf16-quantized weights/inputs, fp32 math.
    w1_r = ref_p["w1"].astype(jnp.bfloat16).astype(jnp.float32)
    w2_r = ref_p["w2"].astype(jnp.bfloat16).astype(jnp.float32)
    b1_r, b2_r = ref_p["b1"], ref_p["b2"]

    ok = True
    # single-tile small-batch path, single-tile medium batch, and multi-tile grid path
    for kx, batch in ((kx1, 8), (kx2, 300), (kx3, 2500)):
        x = jax.random.normal(kx, (batch, input_size), jnp.float32)
        logits = jax.block_until_ready(
            network_forward(x, params, input_size, output_size))
        actions = jax.block_until_ready(
            network_act(x, params, input_size, output_size))

        x_r = x.astype(jnp.bfloat16).astype(jnp.float32)
        h_r = jnp.maximum(x_r @ w1_r + b1_r, 0.0)
        ref = h_r @ w2_r + b2_r

        ok &= logits.shape == (batch, output_size)
        ok &= bool(jnp.allclose(logits, ref, atol=2e-2, rtol=2e-2))
        ok &= actions.shape == (batch,)
        # Fused-argmax check against the kernel's own logits (bitwise-identical y).
        ok &= bool(jnp.all(actions == jnp.argmax(logits, axis=-1).astype(jnp.int32)))

    assert ok, "mismatch vs reference"
    print("KERNEL_OK")
</pallas_src>

<mosaic_0001>
module attributes {stable_mosaic.version = 11 : i64} {
  func.func @mlp_kernel(%arg0: i32, %arg1: memref<16x16xbf16, #tpu.memory_space<vmem>>, %arg2: memref<16x128xbf16, #tpu.memory_space<vmem>>, %arg3: memref<1x128xf32, #tpu.memory_space<vmem>>, %arg4: memref<128x128xbf16, #tpu.memory_space<vmem>>, %arg5: memref<1x128xf32, #tpu.memory_space<vmem>>, %arg6: memref<16x128xf32, #tpu.memory_space<vmem>>) attributes {dimension_semantics = [#tpu.dimension_semantics<parallel>], iteration_bounds = array<i64: 1>, scalar_prefetch = 0 : i64, scratch_operands = 0 : i64, tpu.core_type = #tpu.core_type<tc>, window_params = [{transform_indices = @transform_0, window_bounds = array<i64: 16, 16>}, {pipeline_mode = #tpu.pipeline_mode<synchronous>, transform_indices = @transform_1, window_bounds = array<i64: 16, 128>}, {pipeline_mode = #tpu.pipeline_mode<synchronous>, transform_indices = @transform_2, window_bounds = array<i64: 1, 128>}, {pipeline_mode = #tpu.pipeline_mode<synchronous>, transform_indices = @transform_3, window_bounds = array<i64: 128, 128>}, {pipeline_mode = #tpu.pipeline_mode<synchronous>, transform_indices = @transform_4, window_bounds = array<i64: 1, 128>}, {transform_indices = @transform_5, window_bounds = array<i64: 16, 128>}]} {
    %c0 = arith.constant 0 : index
    %c0_0 = arith.constant 0 : index
    %0 = vector.load %arg1[%c0, %c0_0] : memref<16x16xbf16, #tpu.memory_space<vmem>>, vector<16x16xbf16>
    %c0_1 = arith.constant 0 : index
    %c0_2 = arith.constant 0 : index
    %1 = vector.load %arg2[%c0_1, %c0_2] : memref<16x128xbf16, #tpu.memory_space<vmem>>, vector<16x128xbf16>
    %cst = arith.constant dense<0.000000e+00> : vector<16x128xf32>
    %2 = tpu.matmul %0, %1, %cst {dimension_numbers = #tpu.dot_dimension_numbers<[1], [0], [0], [1], [0, 0, 1, 1], [], []>} : vector<16x16xbf16>, vector<16x128xbf16>, vector<16x128xf32> -> vector<16x128xf32>
    %c0_3 = arith.constant 0 : index
    %c0_4 = arith.constant 0 : index
    %3 = vector.load %arg3[%c0_3, %c0_4] : memref<1x128xf32, #tpu.memory_space<vmem>>, vector<1x128xf32>
    %4 = vector.broadcast %3 : vector<1x128xf32> to vector<16x128xf32>
    %5 = arith.addf %2, %4 : vector<16x128xf32>
    %cst_5 = arith.constant 0.000000e+00 : f32
    %6 = vector.broadcast %cst_5 : f32 to vector<16x128xf32>
    %7 = arith.maximumf %5, %6 : vector<16x128xf32>
    %c0_6 = arith.constant 0 : index
    %c0_7 = arith.constant 0 : index
    %8 = vector.load %arg4[%c0_6, %c0_7] : memref<128x128xbf16, #tpu.memory_space<vmem>>, vector<128x128xbf16>
    %9 = arith.extf %8 : vector<128x128xbf16> to vector<128x128xf32>
    %cst_8 = arith.constant dense<0.000000e+00> : vector<16x128xf32>
    %10 = tpu.matmul %7, %9, %cst_8 {dimension_numbers = #tpu.dot_dimension_numbers<[1], [0], [0], [1], [0, 0, 1, 1], [], []>} : vector<16x128xf32>, vector<128x128xf32>, vector<16x128xf32> -> vector<16x128xf32>
    %c0_9 = arith.constant 0 : index
    %c0_10 = arith.constant 0 : index
    %11 = vector.load %arg5[%c0_9, %c0_10] : memref<1x128xf32, #tpu.memory_space<vmem>>, vector<1x128xf32>
    %12 = vector.broadcast %11 : vector<1x128xf32> to vector<16x128xf32>
    %13 = arith.addf %10, %12 : vector<16x128xf32>
    %c0_11 = arith.constant 0 : index
    %c0_12 = arith.constant 0 : index
    %14 = vector.load %arg6[%c0_11, %c0_12] : memref<16x128xf32, #tpu.memory_space<vmem>>, vector<16x128xf32>
    tpu.vector_store %arg6[%c0_11, %c0_12], %13 {strides = array<i32>} : memref<16x128xf32, #tpu.memory_space<vmem>>, vector<16x128xf32>,
    return
  }
  func.func @transform_0(%arg0: i32) -> (i32, i32) {
    %c0_i32 = arith.constant 0 : i32
    %c0_i32_0 = arith.constant 0 : i32
    return %arg0, %c0_i32 : i32, i32
  }
  func.func @transform_1(%arg0: i32) -> (i32, i32) {
    %c0_i32 = arith.constant 0 : i32
    %c0_i32_0 = arith.constant 0 : i32
    %c0_i32_1 = arith.constant 0 : i32
    return %c0_i32, %c0_i32_0 : i32, i32
  }
  func.func @transform_2(%arg0: i32) -> (i32, i32) {
    %c0_i32 = arith.constant 0 : i32
    %c0_i32_0 = arith.constant 0 : i32
    %c0_i32_1 = arith.constant 0 : i32
    return %c0_i32, %c0_i32_0 : i32, i32
  }
  func.func @transform_3(%arg0: i32) -> (i32, i32) {
    %c0_i32 = arith.constant 0 : i32
    %c0_i32_0 = arith.constant 0 : i32
    %c0_i32_1 = arith.constant 0 : i32
    return %c0_i32, %c0_i32_0 : i32, i32
  }
  func.func @transform_4(%arg0: i32) -> (i32, i32) {
    %c0_i32 = arith.constant 0 : i32
    %c0_i32_0 = arith.constant 0 : i32
    %c0_i32_1 = arith.constant 0 : i32
    return %c0_i32, %c0_i32_0 : i32, i32
  }
  func.func @transform_5(%arg0: i32) -> (i32, i32) {
    %c0_i32 = arith.constant 0 : i32
    %c0_i32_0 = arith.constant 0 : i32
    return %arg0, %c0_i32 : i32, i32
  }
}

</mosaic_0001>

<llo_original>
// kernel: _forward_impl.1
$region0: #{_forward_impl.1}
  #allocation0 [shape = 'u32[]', space=smem, size = 0x4, offset = 0x4, fixed_abs, tag = 'smem constant byte address 0x4 - core index']
  #allocation1 [shape = 'u32[144,128]{1,0:T(1,128)}', space=vmem, size = 0x12000, scoped, tag = 'internal scratch']
  %s0 = inlined_call_operand.vmem [shape: bf16[16,16], index: 0, kind: input, shape index: {}]
  %s1 = inlined_call_operand.vmem [shape: bf16[16,128], index: 1, kind: input, shape index: {}]
  %s2 = inlined_call_operand.vmem [shape: f32[1,128], index: 2, kind: input, shape index: {}]
  %s3 = inlined_call_operand.hbm [shape: bf16[128,128], index: 3, kind: input, shape index: {}]
  %s4 = inlined_call_operand.vmem [shape: f32[1,128], index: 4, kind: input, shape index: {}]
  %s5 = inlined_call_operand.vmem [shape: f32[16,128], index: 5, kind: output, shape index: {}]
  %s6 = sld [smem:[#allocation0]]
  $region34: #{_forward_impl.1} parent=0
    _
  %s8 = ssub.s32 1, %s6
  %s9 = scalar_select 0, %s8, %s6
  $region1: #{_forward_impl.1} parent=0
    #allocation2 [shape = 'u8[32768]{0}', space=vmem, size = 0x8000, scoped, tag = 'input window, operand 3, single buffered']
    #allocation3 [shape = 's32[1]{0}', space=sflag, size = 0x4, scoped, tag = 'scoped memory for _forward_impl.1']
    %10 = vsyncpa [#allocation3], 0
    // Predicated region
    $region2: #{_forward_impl.1} parent=1 // pred_check
      _
    $region3: #{_forward_impl.1} parent=1 // pred_check_branch
      %12 = sbr.rel (0) target = $region5
    $region4: #{_forward_impl.1} parent=1 // pred_region
      _
    $region5: #{_forward_impl.1} parent=1 // pred_fallthru
      _
    // Predicated region
    $region6: #{_forward_impl.1} parent=1 // pred_check
      _
    $region7: #{_forward_impl.1} parent=1 // pred_check_branch
      %14 = sbr.rel (0) target = $region9
    $region8: #{_forward_impl.1} parent=1 // pred_region
      _
    $region9: #{_forward_impl.1} parent=1 // pred_fallthru
      _
    // Predicated region
    $region10: #{_forward_impl.1} parent=1 // pred_check
      _
    $region11: #{_forward_impl.1} parent=1 // pred_check_branch
      %16 = sbr.rel (0) target = $region13
    $region12: #{_forward_impl.1} parent=1 // pred_region
      _
    $region13: #{_forward_impl.1} parent=1 // pred_fallthru
      _
    // Predicated region
    $region14: #{_forward_impl.1} parent=1 // pred_check
      _
    $region15: #{_forward_impl.1} parent=1 // pred_check_branch
      %18 = sbr.rel (0) target = $region17
    $region16: #{_forward_impl.1} parent=1 // pred_region
      %s20 = ssub.s32 1024, 1024
      %21 = vsyncadd [#allocation3], %s20
      %s22 = sshll.u32 [#allocation2], 4
      %s23 = int_to_ptr.vmem [resolvable:$true] %s22
      %28 = dma.hbm_to_vmem [thread:$0]  %s3, 1024, %s23, [#allocation3], 64, 64, 4
    $region17: #{_forward_impl.1} parent=1 // pred_fallthru
      _
    // Predicated region
    $region18: #{_forward_impl.1} parent=1 // pred_check
      _
    $region19: #{_forward_impl.1} parent=1 // pred_check_branch
      %30 = sbr.rel (0) target = $region21
    $region20: #{_forward_impl.1} parent=1 // pred_region
      _
    $region21: #{_forward_impl.1} parent=1 // pred_fallthru
      _
    // Predicated region
    $region22: #{_forward_impl.1} parent=1 // pred_check
      _
    $region23: #{_forward_impl.1} parent=1 // pred_check_branch
      %32 = sbr.rel (0) target = $region25
    $region24: #{_forward_impl.1} parent=1 // pred_region
      %33 = dma.done [#allocation3], 1024
    $region25: #{_forward_impl.1} parent=1 // pred_fallthru
      _
    %v35 = vld [vmem:[%s0] sm:$0xf]
    %v36 = vld [vmem:[%s0 + $0x4] sm:$0xf]
    %v37 = vld [vmem:[%s1] sm:$0xf]
    %v38 = vld [vmem:[%s1 + $0x4] sm:$0xf]
    %v39 = vld [vmem:[%s2] sm:$0x1]
    %v41 = vlaneseq
    %v42 = vshrl.u32 %v41, 7
    %v43 = vsub.s32 0, %v42
    %v44 = vrot.slane %v39, %v43
    %v48 = vunpack.c.l.b16 %v35
    %v49 = vunpack.c.l.b16 %v36
    %v50 = vpack.c.b16 %v49, %v48
    %v53 = vunpack.c.l.b16 %v37
    %v54 = vunpack.c.l.b16 %v38
    %v55 = vpack.c.b16 %v54, %v53
    %vm57 = vcmask 130048
    %v59 = vsel %vm57, %v50, 0
    %61 = vmatprep.subr.bf16.mxu0 0
    %62 = vmatpush1.bf16.msra.mxu0 0
    %63 = vmatprep.subr.bf16.mxu0 0
    %64 = vmatpush1.bf16.msra.mxu0 0
    %65 = vmatprep.subr.bf16.mxu0 0
    %66 = vmatpush1.bf16.msra.mxu0 0
    %67 = vmatprep.subr.bf16.mxu0 0
    %68 = vmatpush1.bf16.msra.mxu0 0
    %69 = vmatprep.subr.bf16.mxu0 0
    %70 = vmatpush1.bf16.msra.mxu0 0
    %71 = vmatprep.subr.bf16.mxu0 0
    %72 = vmatpush1.bf16.msra.mxu0 0
    %73 = vmatprep.subr.bf16.mxu0 0
    %74 = vmatpush1.bf16.msra.mxu0 0
    %75 = vmatprep.subr.bf16.mxu0 0
    %76 = vmatpush1.bf16.msra.mxu0 %v55
    %77 = vmatprep.subr.bf16.mxu0 0
    %78 = vmatpush2.bf16.msra.mxu0 0
    %79 = vmatprep.subr.bf16.mxu0 0
    %80 = vmatpush2.bf16.msra.mxu0 0
    %81 = vmatprep.subr.bf16.mxu0 0
    %82 = vmatpush2.bf16.msra.mxu0 0
    %83 = vmatprep.subr.bf16.mxu0 0
    %84 = vmatpush2.bf16.msra.mxu0 0
    %85 = vmatprep.subr.bf16.mxu0 0
    %86 = vmatpush2.bf16.msra.mxu0 0
    %87 = vmatprep.subr.bf16.mxu0 0
    %88 = vmatpush2.bf16.msra.mxu0 0
    %89 = vmatprep.subr.bf16.mxu0 0
    %90 = vmatpush2.bf16.msra.mxu0 0
    %91 = vmatprep.subr.bf16.mxu0 0
    %92 = vmatpush2.bf16.msra.mxu0 0
    %93 = vmatprep.mubr.bf16.mxu0 0
    %94 = vmatmul.mubr.bf16.gmra.mxu0 %v59
    %v95 = vpop.f32.mrf.mxu0
    %v96 = vadd.f32 %v44, %v95
    %v97 = vpop.f32.mrf.mxu0
    %v98 = vpop.f32.mrf.mxu0
    %v99 = vadd.f32 %v44, %v98
    %v100 = vpop.f32.mrf.mxu0
    %101 = vdwg.mxu0
    %v102 = vmax.f32 %v96, 0.0
    %v103 = vmax.f32 %v99, 0.0
    %v104 = vld [vmem:[#allocation2] sm:$0xf]
    %v105 = vld [vmem:[#allocation2 + $0x4] sm:$0xf]
    %v106 = vld [vmem:[#allocation2 + $0x8] sm:$0xf]
    %v107 = vld [vmem:[#allocation2 + $0xc] sm:$0xf]
    %v108 = vld [vmem:[#allocation2 + $0x10] sm:$0xf]
    %v109 = vld [vmem:[#allocation2 + $0x14] sm:$0xf]
    %v110 = vld [vmem:[#allocation2 + $0x18] sm:$0xf]
    %v111 = vld [vmem:[#allocation2 + $0x1c] sm:$0xf]
    %v112 = vld [vmem:[#allocation2 + $0x20] sm:$0xf]
    %v113 = vld [vmem:[#allocation2 + $0x24] sm:$0xf]
    %v114 = vld [vmem:[#allocation2 + $0x28] sm:$0xf]
    %v115 = vld [vmem:[#allocation2 + $0x2c] sm:$0xf]
    %v116 = vld [vmem:[#allocation2 + $0x30] sm:$0xf]
    %v117 = vld [vmem:[#allocation2 + $0x34] sm:$0xf]
    %v118 = vld [vmem:[#allocation2 + $0x38] sm:$0xf]
    %v119 = vld [vmem:[#allocation2 + $0x3c] sm:$0xf]
    %v120 = vunpack.c.l.bf16 %v104
    %v121 = vunpack.c.l.bf16 %v105
    %v122 = vunpack.c.l.bf16 %v106
    %v123 = vunpack.c.l.bf16 %v107
    %v124 = vunpack.c.l.bf16 %v108
    %v125 = vunpack.c.l.bf16 %v109
    %v126 = vunpack.c.l.bf16 %v110
    %v127 = vunpack.c.l.bf16 %v111
    %v128 = vunpack.c.l.bf16 %v112
    %v129 = vunpack.c.l.bf16 %v113
    %v130 = vunpack.c.l.bf16 %v114
    %v131 = vunpack.c.l.bf16 %v115
    %v132 = vunpack.c.l.bf16 %v116
    %v133 = vunpack.c.l.bf16 %v117
    %v134 = vunpack.c.l.bf16 %v118
    %v135 = vunpack.c.l.bf16 %v119
    %v136 = vld [vmem:[%s4] sm:$0x1]
    %v138 = vlaneseq
    %v139 = vshrl.u32 %v138, 7
    %v140 = vsub.s32 0, %v139
    %v141 = vrot.slane %v136, %v140
    %143 = vmatprep.subr.mxu0 0.0
    %144 = vmatpush1.msra.mxu0 %v135
    %145 = vmatprep.subr.mxu0 0.0
    %146 = vmatpush1.msra.mxu0 %v134
    %147 = vmatprep.subr.mxu0 0.0
    %148 = vmatpush1.msra.mxu0 %v133
    %149 = vmatprep.subr.mxu0 0.0
    %150 = vmatpush1.msra.mxu0 %v132
    %151 = vmatprep.subr.mxu0 0.0
    %152 = vmatpush1.msra.mxu0 %v131
    %153 = vmatprep.subr.mxu0 0.0
    %154 = vmatpush1.msra.mxu0 %v130
    %155 = vmatprep.subr.mxu0 0.0
    %156 = vmatpush1.msra.mxu0 %v129
    %157 = vmatprep.subr.mxu0 0.0
    %158 = vmatpush1.msra.mxu0 %v128
    %159 = vmatprep.subr.mxu0 0.0
    %160 = vmatpush1.msra.mxu0 %v127
    %161 = vmatprep.subr.mxu0 0.0
    %162 = vmatpush1.msra.mxu0 %v126
    %163 = vmatprep.subr.mxu0 0.0
    %164 = vmatpush1.msra.mxu0 %v125
    %165 = vmatprep.subr.mxu0 0.0
    %166 = vmatpush1.msra.mxu0 %v124
    %167 = vmatprep.subr.mxu0 0.0
    %168 = vmatpush1.msra.mxu0 %v123
    %169 = vmatprep.subr.mxu0 0.0
    %170 = vmatpush1.msra.mxu0 %v122
    %171 = vmatprep.subr.mxu0 0.0
    %172 = vmatpush1.msra.mxu0 %v121
    %173 = vmatprep.subr.mxu0 0.0
    %174 = vmatpush1.msra.mxu0 %v120
    %175 = vmatprep.subr.mxu0 0.0
    %176 = vmatpush2.msra.mxu0 0.0
    %177 = vmatprep.subr.mxu0 0.0
    %178 = vmatpush2.msra.mxu0 0.0
    %179 = vmatprep.subr.mxu0 0.0
    %180 = vmatpush2.msra.mxu0 0.0
    %181 = vmatprep.subr.mxu0 0.0
    %182 = vmatpush2.msra.mxu0 0.0
    %183 = vmatprep.subr.mxu0 0.0
    %184 = vmatpush2.msra.mxu0 0.0
    %185 = vmatprep.subr.mxu0 0.0
    %186 = vmatpush2.msra.mxu0 0.0
    %187 = vmatprep.subr.mxu0 0.0
    %188 = vmatpush2.msra.mxu0 0.0
    %189 = vmatprep.subr.mxu0 0.0
    %190 = vmatpush2.msra.mxu0 0.0
    %191 = vmatprep.subr.mxu0 0.0
    %192 = vmatpush2.msra.mxu0 0.0
    %193 = vmatprep.subr.mxu0 0.0
    %194 = vmatpush2.msra.mxu0 0.0
    %195 = vmatprep.subr.mxu0 0.0
    %196 = vmatpush2.msra.mxu0 0.0
    %197 = vmatprep.subr.mxu0 0.0
    %198 = vmatpush2.msra.mxu0 0.0
    %199 = vmatprep.subr.mxu0 0.0
    %200 = vmatpush2.msra.mxu0 0.0
    %201 = vmatprep.subr.mxu0 0.0
    %202 = vmatpush2.msra.mxu0 0.0
    %203 = vmatprep.subr.mxu0 0.0
    %204 = vmatpush2.msra.mxu0 0.0
    %205 = vmatprep.subr.mxu0 0.0
    %206 = vmatpush2.msra.mxu0 0.0
    %207 = vmatprep.mubr.f32.mxu0 0.0
    %208 = vmatmul.mubr.f32.gmra.mxu0 %v102
    %v209 = vpop.f32.mrf.mxu0
    %v210 = vadd.f32 %v141, %v209
    %v211 = vpop.f32.mrf.mxu0
    %212 = vmatprep.mubr.f32.mxu0 0.0
    %213 = vmatmul.mubr.f32.gmra.mxu0 %v103
    %v214 = vpop.f32.mrf.mxu0
    %v215 = vadd.f32 %v141, %v214
    %v216 = vpop.f32.mrf.mxu0
    %217 = vdwg.mxu0
    %218 = vst [vmem:[%s5] sm:$0xff] %v210
    %219 = vst [vmem:[%s5 + $0x8] sm:$0xff] %v215
    // Predicated region
    $region26: #{_forward_impl.1} parent=1 // pred_check
      _
    $region27: #{_forward_impl.1} parent=1 // pred_check_branch
      %221 = sbr.rel (0) target = $region29
    $region28: #{_forward_impl.1} parent=1 // pred_region
      _
    $region29: #{_forward_impl.1} parent=1 // pred_fallthru
      _
    // Predicated region
    $region30: #{_forward_impl.1} parent=1 // pred_check
      _
    $region31: #{_forward_impl.1} parent=1 // pred_check_branch
      %223 = sbr.rel (0) target = $region33
    $region32: #{_forward_impl.1} parent=1 // pred_region
      _
    $region33: #{_forward_impl.1} parent=1 // pred_fallthru
      _
    %224 = vsyncpa [#allocation3], 1

</llo_original>
